<compile_context>
chip_gen: v5e
topology: v5e:2x2
jax: 0.10.0
libtpu: 0.0.40
codegen_flags: <defaults>
</compile_context>

<pallas_src>
from functools import partial

import jax
import jax.numpy as jnp
from jax import lax
from jax.experimental import pallas as pl
from jax.experimental.pallas import tpu as pltpu


def _round_up(x, m):
    return ((x + m - 1) // m) * m


def _write_out_row(out_ref, total, mag_loss, dir_loss):
    """Pack the three scalars into one lane-dense (1, 128) f32 row."""
    lane = lax.broadcasted_iota(jnp.int32, (1, 128), 1)
    out_ref[...] = jnp.where(
        lane == 0, total,
        jnp.where(lane == 1, mag_loss,
                  jnp.where(lane == 2, dir_loss, 0.0))).astype(jnp.float32)


def _masked_tile(vel_ref, k, tile_g, n_genes, mask_ragged):
    """Load the current (B, TG) velocity tile; zero garbage lanes of a ragged last tile."""
    v = vel_ref[...]
    if mask_ragged:  # static python bool: code only emitted when G % TG != 0
        col = k * tile_g + lax.broadcasted_iota(jnp.int32, v.shape, 1)
        v = jnp.where(col < n_genes, v, jnp.zeros_like(v))
    return v


def _losses_from_gram(gram, weight):
    """magnitude / direction losses from the unnormalized Gram matrix G = V @ V.T.

    `weight` is either the (B, B) f32 similarity matrix or a python-float uniform weight.
    Uses axis-0 and axis-1 diagonal reductions to get both row- and column-oriented
    norms without any in-kernel transpose.
    """
    b = gram.shape[0]
    rows = lax.broadcasted_iota(jnp.int32, (b, b), 0)
    cols = lax.broadcasted_iota(jnp.int32, (b, b), 1)
    diag = jnp.where(rows == cols, gram, 0.0)
    sq_col = jnp.sum(diag, axis=1, keepdims=True)          # (B, 1)  ||v_i||^2
    sq_row = jnp.sum(diag, axis=0, keepdims=True)          # (1, B)  ||v_j||^2
    m_col = jnp.sqrt(sq_col)                                # exact ||v_i||
    m_row = jnp.sqrt(sq_row)
    # 1/max(||v||, 1e-12) == rsqrt(max(||v||^2, 1e-24))  (torch F.normalize eps semantics)
    invm_col = lax.rsqrt(jnp.maximum(sq_col, 1e-24))
    invm_row = lax.rsqrt(jnp.maximum(sq_row, 1e-24))
    diff = m_col - m_row                                    # (B, B)
    cos = gram * (invm_col * invm_row)                      # (B, B)
    mag_loss = jnp.sum(weight * (diff * diff))
    dir_loss = jnp.sum(weight * (1.0 - cos))
    return mag_loss, dir_loss


# ----------------------------------------------------------------------------
# Kernel A: explicit similarity matrix.  Grid = (gene_tile,), single pass.
# ----------------------------------------------------------------------------
def _coherence_sim_kernel(vel_ref, sim_hbm, out_ref,
                          gram_acc, sim_buf, sim_sem,
                          *, magnitude_weight, direction_weight,
                          n_genes, tile_g, mask_ragged):
    k = pl.program_id(0)
    nk = pl.num_programs(0)

    @pl.when(k == 0)
    def _init():
        gram_acc[...] = jnp.zeros_like(gram_acc)
        # Single-buffered, one-shot DMA of sim; overlapped with Gram accumulation.
        pltpu.make_async_copy(sim_hbm, sim_buf, sim_sem).start()

    v = _masked_tile(vel_ref, k, tile_g, n_genes, mask_ragged)
    # Native-dtype operands (bf16 stays bf16) -> f32 accumulation on the MXU.
    gram_acc[...] += lax.dot_general(
        v, v, dimension_numbers=(((1,), (1,)), ((), ())),
        preferred_element_type=jnp.float32)

    @pl.when(k == nk - 1)
    def _finalize():
        pltpu.make_async_copy(sim_hbm, sim_buf, sim_sem).wait()
        sim = sim_buf[...].astype(jnp.float32)               # converted exactly once
        mag_loss, dir_loss = _losses_from_gram(gram_acc[...], sim)
        total = magnitude_weight * mag_loss + direction_weight * dir_loss
        _write_out_row(out_ref, total, mag_loss, dir_loss)


# ----------------------------------------------------------------------------
# Kernel B: uniform similarity (similarity_matrix=None) — same single pass,
# no (B, B) input at all; the uniform 1/B weight is folded in at finalize.
# ----------------------------------------------------------------------------
def _coherence_uniform_kernel(vel_ref, out_ref, gram_acc,
                              *, magnitude_weight, direction_weight,
                              batch, n_genes, tile_g, mask_ragged):
    k = pl.program_id(0)
    nk = pl.num_programs(0)

    @pl.when(k == 0)
    def _init():
        gram_acc[...] = jnp.zeros_like(gram_acc)

    v = _masked_tile(vel_ref, k, tile_g, n_genes, mask_ragged)
    gram_acc[...] += lax.dot_general(
        v, v, dimension_numbers=(((1,), (1,)), ((), ())),
        preferred_element_type=jnp.float32)

    @pl.when(k == nk - 1)
    def _finalize():
        mag_loss, dir_loss = _losses_from_gram(gram_acc[...], 1.0 / batch)
        total = magnitude_weight * mag_loss + direction_weight * dir_loss
        _write_out_row(out_ref, total, mag_loss, dir_loss)


# ----------------------------------------------------------------------------
# Wrapper
# ----------------------------------------------------------------------------
def velocity_coherence_loss(velocities, similarity_matrix=None,
                            magnitude_weight=1.0, direction_weight=1.0,
                            gene_tile=None):
    """JAX/Pallas equivalent of VelocityCoherenceLoss.forward."""
    b, g = velocities.shape
    itemsize = jnp.dtype(velocities.dtype).itemsize

    # Adaptive gene tile: ~2 MiB per velocity block (double-buffered -> ~4 MiB),
    # lane-multiple, or the full gene extent if it fits in one tile.
    if gene_tile is None:
        gene_tile = max(128, ((2 << 20) // max(1, b * itemsize)) // 128 * 128)
    if g <= gene_tile:
        tg, kg = g, 1                       # full-extent block: no masking needed
    else:
        tg = max(128, (gene_tile // 128) * 128)
        kg = -(-g // tg)
    mask_ragged = (kg > 1) and (g % tg != 0)

    vel_spec = pl.BlockSpec((b, tg), lambda k: (0, k))
    out_shape = jax.ShapeDtypeStruct((1, 128), jnp.float32)
    out_spec = pl.BlockSpec((1, 128), lambda k: (0, 0))

    # Explicit scoped-VMEM budget (layout-padded sizes + headroom).
    bq, bl = _round_up(b, 8), _round_up(b, 128)
    vel_bytes = 2 * bq * _round_up(tg, 128) * itemsize        # double-buffered input
    gram_bytes = bq * bl * 4
    sim_itemsize = (jnp.dtype(similarity_matrix.dtype).itemsize
                    if similarity_matrix is not None else 0)
    sim_bytes = bq * bl * sim_itemsize                        # single-buffered scratch
    needed = vel_bytes + gram_bytes + sim_bytes + (1 << 20)
    vmem_limit = int(min(128 << 20, max(needed + (8 << 20), 24 << 20)))
    # TODO(synk): for b >= ~2048 the (B,B) Gram/sim no longer fit v7x's 64 MiB VMEM;
    # that regime needs a batch-tiled Gram (extra grid axes over batch blocks).
    # TODO(synk): on v7x, split the gene axis across the two TensorCores (leading
    # parallel axis + partial-Gram combine) to use both cores' HBM bandwidth.

    compiler_params = pltpu.CompilerParams(
        dimension_semantics=("arbitrary",), vmem_limit_bytes=vmem_limit)

    if similarity_matrix is None:
        kernel = partial(_coherence_uniform_kernel,
                         magnitude_weight=float(magnitude_weight),
                         direction_weight=float(direction_weight),
                         batch=int(b), n_genes=int(g), tile_g=int(tg),
                         mask_ragged=mask_ragged)
        cost = pl.CostEstimate(
            flops=int(2 * b * b * g + 10 * b * b),
            transcendentals=int(4 * b),
            bytes_accessed=int(b * g * itemsize + 512))
        out = pl.pallas_call(
            kernel,
            out_shape=out_shape,
            grid_spec=pltpu.PrefetchScalarGridSpec(
                num_scalar_prefetch=0,
                grid=(kg,),
                in_specs=[vel_spec],
                out_specs=out_spec,
                scratch_shapes=[pltpu.VMEM((b, b), jnp.float32)]),
            compiler_params=compiler_params,
            cost_estimate=cost,
        )(velocities)
    else:
        sim = similarity_matrix
        kernel = partial(_coherence_sim_kernel,
                         magnitude_weight=float(magnitude_weight),
                         direction_weight=float(direction_weight),
                         n_genes=int(g), tile_g=int(tg),
                         mask_ragged=mask_ragged)
        cost = pl.CostEstimate(
            flops=int(2 * b * b * g + 12 * b * b),
            transcendentals=int(4 * b),
            bytes_accessed=int(b * g * itemsize + b * b * sim_itemsize + 512))
        out = pl.pallas_call(
            kernel,
            out_shape=out_shape,
            grid_spec=pltpu.PrefetchScalarGridSpec(
                num_scalar_prefetch=0,
                grid=(kg,),
                in_specs=[vel_spec,
                          pl.BlockSpec(memory_space=pl.ANY)],   # raw ref; one manual DMA
                out_specs=out_spec,
                scratch_shapes=[pltpu.VMEM((b, b), jnp.float32),  # Gram accumulator
                                pltpu.VMEM((b, b), sim.dtype),    # single-buffered sim
                                pltpu.SemaphoreType.DMA(())]),
            compiler_params=compiler_params,
            cost_estimate=cost,
        )(velocities, sim)

    return {"total": out[0, 0], "magnitude": out[0, 1], "direction": out[0, 2]}


# ----------------------------------------------------------------------------
# Pure-JAX reference mirroring the PyTorch code (for sanity checking).
# ----------------------------------------------------------------------------
def _reference(velocities, similarity_matrix=None,
               magnitude_weight=1.0, direction_weight=1.0):
    b, _ = velocities.shape
    v = velocities.astype(jnp.float32)
    if similarity_matrix is None:
        similarity_matrix = jnp.ones((b, b), jnp.float32) / b
    sim = similarity_matrix.astype(jnp.float32)
    mag = jnp.linalg.norm(v, axis=1, keepdims=True)
    diff = mag - mag.T
    mag_loss = jnp.sum(sim * diff ** 2)
    vn = v / jnp.maximum(mag, 1e-12)
    cos = jnp.matmul(vn, vn.T, precision=lax.Precision.HIGHEST)
    dir_loss = jnp.sum(sim * (1.0 - cos))
    total = magnitude_weight * mag_loss + direction_weight * dir_loss
    return total, mag_loss, dir_loss


if __name__ == "__main__":
    key = jax.random.PRNGKey(0)
    k_v, k_s, k_v2 = jax.random.split(key, 3)

    batch_size, n_genes = 8, 32
    velocities = jax.random.normal(k_v, (batch_size, n_genes), dtype=jnp.float32)
    similarity = jax.nn.softmax(
        jax.random.normal(k_s, (batch_size, batch_size), dtype=jnp.float32), axis=-1)

    # Case 1: default uniform similarity (similarity_matrix=None).
    out_uniform = velocity_coherence_loss(velocities, None,
                                          magnitude_weight=1.0, direction_weight=1.0)
    # Case 2: explicit similarity matrix and non-unit weights.
    out_sim = velocity_coherence_loss(velocities, similarity,
                                      magnitude_weight=0.5, direction_weight=2.0)
    # Case 3: ragged gene axis forcing the multi-tile + masked-last-tile path.
    velocities2 = jax.random.normal(k_v2, (batch_size, 200), dtype=jnp.float32)
    out_ragged = velocity_coherence_loss(velocities2, similarity,
                                         magnitude_weight=1.0, direction_weight=1.0,
                                         gene_tile=128)

    jax.block_until_ready(out_uniform["total"])
    jax.block_until_ready(out_sim["total"])
    jax.block_until_ready(out_ragged["total"])

    ref_t1, ref_m1, ref_d1 = _reference(velocities, None, 1.0, 1.0)
    ref_t2, ref_m2, ref_d2 = _reference(velocities, similarity, 0.5, 2.0)
    ref_t3, ref_m3, ref_d3 = _reference(velocities2, similarity, 1.0, 1.0)

    assert jnp.allclose(out_uniform["total"], ref_t1, rtol=1e-3, atol=1e-3)
    assert jnp.allclose(out_uniform["magnitude"], ref_m1, rtol=1e-3, atol=1e-3)
    assert jnp.allclose(out_uniform["direction"], ref_d1, rtol=1e-3, atol=1e-3)
    assert jnp.allclose(out_sim["total"], ref_t2, rtol=1e-3, atol=1e-3)
    assert jnp.allclose(out_sim["magnitude"], ref_m2, rtol=1e-3, atol=1e-3)
    assert jnp.allclose(out_sim["direction"], ref_d2, rtol=1e-3, atol=1e-3)
    assert jnp.allclose(out_ragged["total"], ref_t3, rtol=1e-3, atol=1e-3)
    assert jnp.allclose(out_ragged["magnitude"], ref_m3, rtol=1e-3, atol=1e-3)
    assert jnp.allclose(out_ragged["direction"], ref_d3, rtol=1e-3, atol=1e-3)

    print("KERNEL_OK")
</pallas_src>

<mosaic_0001>
module attributes {stable_mosaic.version = 11 : i64} {
  func.func @_coherence_uniform_kernel(%arg0: i32, %arg1: memref<8x32xf32, #tpu.memory_space<vmem>>, %arg2: memref<1x128xf32, #tpu.memory_space<vmem>>, %arg3: memref<8x8xf32, #tpu.memory_space<vmem>>) attributes {dimension_semantics = [#tpu.dimension_semantics<arbitrary>], iteration_bounds = array<i64: 1>, scalar_prefetch = 0 : i64, scratch_operands = 1 : i64, tpu.core_type = #tpu.core_type<tc>, window_params = [{transform_indices = @transform_0, window_bounds = array<i64: 8, 32>}, {pipeline_mode = #tpu.pipeline_mode<synchronous>, transform_indices = @transform_1, window_bounds = array<i64: 1, 128>}]} {
    %c0_i32 = arith.constant 0 : i32
    %0 = arith.cmpi eq, %arg0, %c0_i32 : i32
    %1 = arith.extui %0 : i1 to i32
    %c0_i32_0 = arith.constant 0 : i32
    %2 = arith.cmpi ne, %1, %c0_i32_0 : i32
    scf.if %2 {
      %cst_8 = arith.constant 0.000000e+00 : f32
      %11 = vector.broadcast %cst_8 : f32 to vector<8x8xf32>
      %c0_9 = arith.constant 0 : index
      %c0_10 = arith.constant 0 : index
      %12 = vector.load %arg3[%c0_9, %c0_10] : memref<8x8xf32, #tpu.memory_space<vmem>>, vector<8x8xf32>
      tpu.vector_store %arg3[%c0_9, %c0_10], %11 {strides = array<i32>} : memref<8x8xf32, #tpu.memory_space<vmem>>, vector<8x8xf32>,
    } else {
    }
    %c0 = arith.constant 0 : index
    %c0_1 = arith.constant 0 : index
    %3 = vector.load %arg1[%c0, %c0_1] : memref<8x32xf32, #tpu.memory_space<vmem>>, vector<8x32xf32>
    %c0_2 = arith.constant 0 : index
    %c0_3 = arith.constant 0 : index
    %4 = vector.load %arg3[%c0_2, %c0_3] : memref<8x8xf32, #tpu.memory_space<vmem>>, vector<8x8xf32>
    %cst = arith.constant dense<0.000000e+00> : vector<8x8xf32>
    %5 = tpu.matmul %3, %3, %cst {dimension_numbers = #tpu.dot_dimension_numbers<[1], [1], [0], [0], [0, 0, 1, 0], [], []>} : vector<8x32xf32>, vector<8x32xf32>, vector<8x8xf32> -> vector<8x8xf32>
    %6 = arith.addf %4, %5 : vector<8x8xf32>
    %c0_4 = arith.constant 0 : index
    %c0_5 = arith.constant 0 : index
    %7 = vector.load %arg3[%c0_4, %c0_5] : memref<8x8xf32, #tpu.memory_space<vmem>>, vector<8x8xf32>
    tpu.vector_store %arg3[%c0_4, %c0_5], %6 {strides = array<i32>} : memref<8x8xf32, #tpu.memory_space<vmem>>, vector<8x8xf32>,
    %c0_i32_6 = arith.constant 0 : i32
    %8 = arith.cmpi eq, %arg0, %c0_i32_6 : i32
    %9 = arith.extui %8 : i1 to i32
    %c0_i32_7 = arith.constant 0 : i32
    %10 = arith.cmpi ne, %9, %c0_i32_7 : i32
    scf.if %10 {
      %c0_8 = arith.constant 0 : index
      %c0_9 = arith.constant 0 : index
      %11 = vector.load %arg3[%c0_8, %c0_9] : memref<8x8xf32, #tpu.memory_space<vmem>>, vector<8x8xf32>
      %12 = tpu.iota {dimensions = array<i32: 0>} : vector<8x8xi32>
      %13 = tpu.iota {dimensions = array<i32: 1>} : vector<8x8xi32>
      %14 = arith.cmpi eq, %12, %13 : vector<8x8xi32>
      %cst_10 = arith.constant 0.000000e+00 : f32
      %15 = vector.broadcast %cst_10 : f32 to vector<8x8xf32>
      %16 = arith.select %14, %11, %15 : vector<8x8xi1>, vector<8x8xf32>
      %cst_11 = arith.constant dense<0.000000e+00> : vector<8xf32>
      %17 = vector.multi_reduction <add>, %16, %cst_11 [1] : vector<8x8xf32> to vector<8xf32>
      %18 = vector.shape_cast %17 : vector<8xf32> to vector<8x1xf32>
      %cst_12 = arith.constant dense<0.000000e+00> : vector<8xf32>
      %19 = vector.multi_reduction <add>, %16, %cst_12 [0] : vector<8x8xf32> to vector<8xf32>
      %20 = vector.shape_cast %19 : vector<8xf32> to vector<1x8xf32>
      %21 = math.sqrt %18 : vector<8x1xf32>
      %22 = math.sqrt %20 : vector<1x8xf32>
      %cst_13 = arith.constant 1.000000e-24 : f32
      %23 = vector.broadcast %cst_13 : f32 to vector<8x1xf32>
      %24 = arith.maximumf %18, %23 : vector<8x1xf32>
      %25 = math.rsqrt %24 : vector<8x1xf32>
      %cst_14 = arith.constant 1.000000e-24 : f32
      %26 = vector.broadcast %cst_14 : f32 to vector<1x8xf32>
      %27 = arith.maximumf %20, %26 : vector<1x8xf32>
      %28 = math.rsqrt %27 : vector<1x8xf32>
      %29 = vector.broadcast %21 : vector<8x1xf32> to vector<8x8xf32>
      %30 = vector.broadcast %22 : vector<1x8xf32> to vector<8x8xf32>
      %31 = arith.subf %29, %30 : vector<8x8xf32>
      %32 = vector.broadcast %25 : vector<8x1xf32> to vector<8x8xf32>
      %33 = vector.broadcast %28 : vector<1x8xf32> to vector<8x8xf32>
      %34 = arith.mulf %32, %33 : vector<8x8xf32>
      %35 = arith.mulf %11, %34 : vector<8x8xf32>
      %36 = arith.mulf %31, %31 : vector<8x8xf32>
      %cst_15 = arith.constant 1.250000e-01 : f32
      %37 = vector.broadcast %cst_15 : f32 to vector<8x8xf32>
      %38 = arith.mulf %37, %36 : vector<8x8xf32>
      %39 = vector.shape_cast %38 : vector<8x8xf32> to vector<1x8x8xf32>
      %cst_16 = arith.constant dense<0.000000e+00> : vector<1xf32>
      %40 = vector.multi_reduction <add>, %39, %cst_16 [1, 2] : vector<1x8x8xf32> to vector<1xf32>
      %41 = vector.shape_cast %40 : vector<1xf32> to vector<1x1x1xf32>
      %42 = vector.extract %41[0, 0, 0] : f32 from vector<1x1x1xf32>
      %cst_17 = arith.constant 1.000000e+00 : f32
      %43 = vector.broadcast %cst_17 : f32 to vector<8x8xf32>
      %44 = arith.subf %43, %35 : vector<8x8xf32>
      %cst_18 = arith.constant 1.250000e-01 : f32
      %45 = vector.broadcast %cst_18 : f32 to vector<8x8xf32>
      %46 = arith.mulf %45, %44 : vector<8x8xf32>
      %47 = vector.shape_cast %46 : vector<8x8xf32> to vector<1x8x8xf32>
      %cst_19 = arith.constant dense<0.000000e+00> : vector<1xf32>
      %48 = vector.multi_reduction <add>, %47, %cst_19 [1, 2] : vector<1x8x8xf32> to vector<1xf32>
      %49 = vector.shape_cast %48 : vector<1xf32> to vector<1x1x1xf32>
      %50 = vector.extract %49[0, 0, 0] : f32 from vector<1x1x1xf32>
      %cst_20 = arith.constant 1.000000e+00 : f32
      %51 = arith.mulf %cst_20, %42 : f32
      %cst_21 = arith.constant 1.000000e+00 : f32
      %52 = arith.mulf %cst_21, %50 : f32
      %53 = arith.addf %51, %52 : f32
      %54 = tpu.iota {dimensions = array<i32: 1>} : vector<1x128xi32>
      %c0_i32_22 = arith.constant 0 : i32
      %55 = vector.broadcast %c0_i32_22 : i32 to vector<1x128xi32>
      %56 = arith.cmpi eq, %54, %55 : vector<1x128xi32>
      %c1_i32 = arith.constant 1 : i32
      %57 = vector.broadcast %c1_i32 : i32 to vector<1x128xi32>
      %58 = arith.cmpi eq, %54, %57 : vector<1x128xi32>
      %c2_i32 = arith.constant 2 : i32
      %59 = vector.broadcast %c2_i32 : i32 to vector<1x128xi32>
      %60 = arith.cmpi eq, %54, %59 : vector<1x128xi32>
      %cst_23 = arith.constant 0.000000e+00 : f32
      %61 = vector.broadcast %50 : f32 to vector<1x128xf32>
      %62 = vector.broadcast %cst_23 : f32 to vector<1x128xf32>
      %63 = arith.select %60, %61, %62 : vector<1x128xi1>, vector<1x128xf32>
      %64 = vector.broadcast %42 : f32 to vector<1x128xf32>
      %65 = arith.select %58, %64, %63 : vector<1x128xi1>, vector<1x128xf32>
      %66 = vector.broadcast %53 : f32 to vector<1x128xf32>
      %67 = arith.select %56, %66, %65 : vector<1x128xi1>, vector<1x128xf32>
      %c0_24 = arith.constant 0 : index
      %c0_25 = arith.constant 0 : index
      %68 = vector.load %arg2[%c0_24, %c0_25] : memref<1x128xf32, #tpu.memory_space<vmem>>, vector<1x128xf32>
      tpu.vector_store %arg2[%c0_24, %c0_25], %67 {strides = array<i32>} : memref<1x128xf32, #tpu.memory_space<vmem>>, vector<1x128xf32>,
    } else {
    }
    return
  }
  func.func @transform_0(%arg0: i32) -> (i32, i32) {
    %c0_i32 = arith.constant 0 : i32
    %c0_i32_0 = arith.constant 0 : i32
    return %c0_i32, %arg0 : i32, i32
  }
  func.func @transform_1(%arg0: i32) -> (i32, i32) {
    %c0_i32 = arith.constant 0 : i32
    %c0_i32_0 = arith.constant 0 : i32
    %c0_i32_1 = arith.constant 0 : i32
    return %c0_i32, %c0_i32_0 : i32, i32
  }
}

</mosaic_0001>

<llo_original>
// kernel: tpu_custom_call.1
$region0: #{tpu_custom_call.1}
  #allocation0 [shape = 'u32[]', space=smem, size = 0x4, offset = 0x4, fixed_abs, tag = 'smem constant byte address 0x4 - core index']
  #allocation1 [shape = 'u32[72,128]{1,0:T(1,128)}', space=vmem, size = 0x9000, scoped, tag = 'internal scratch']
  #allocation2 [shape = 'f32[8,8]{1,0:T(8,128)}', space=vmem, size = 0x1000, scoped, tag = 'scratch operand']
  %s0 = inlined_call_operand.hbm [shape: f32[8,32], index: 0, kind: input, shape index: {}]
  %s1 = inlined_call_operand.hbm [shape: f32[1,128], index: 1, kind: output, shape index: {}]
  %s2 = sld [smem:[#allocation0]]
  $region26: #{tpu_custom_call.1} parent=0
    _
  %s4 = ssub.s32 1, %s2
  %s5 = scalar_select 0, %s4, %s2
  $region1: #{tpu_custom_call.1} parent=0
    #allocation3 [shape = 'u8[4096]{0}', space=vmem, size = 0x1000, scoped, tag = 'input window, operand 0, single buffered']
    #allocation4 [shape = 's32[1]{0}', space=sflag, size = 0x4, scoped, tag = 'scoped memory for tpu_custom_call.1']
    #allocation5 [shape = 's32[1]{0}', space=sflag, size = 0x4, scoped, tag = 'scoped memory for tpu_custom_call.1']
    #allocation6 [shape = 'u8[512]{0}', space=vmem, size = 0x400, scoped, tag = 'output window, operand 0, single buffered']
    %6 = vsyncpa [#allocation4], 0
    %7 = vsyncpa [#allocation5], 0
    // Predicated region
    $region2: #{tpu_custom_call.1} parent=1 // pred_check
      _
    $region3: #{tpu_custom_call.1} parent=1 // pred_check_branch
      %9 = sbr.rel (0) target = $region5
    $region4: #{tpu_custom_call.1} parent=1 // pred_region
      %11 = vsyncadd [#allocation4], 0
      %s13 = sshll.u32 %s0, 4
      %s14 = int_to_ptr.hbm [resolvable:$true] %s13
      %s15 = sshll.u32 [#allocation3], 4
      %s16 = int_to_ptr.vmem [resolvable:$true] %s15
      %18 = dma.hbm_to_vmem [thread:$0]  %s14, 128, %s16, [#allocation4]
    $region5: #{tpu_custom_call.1} parent=1 // pred_fallthru
      _
    // Predicated region
    $region6: #{tpu_custom_call.1} parent=1 // pred_check
      _
    $region7: #{tpu_custom_call.1} parent=1 // pred_check_branch
      %20 = sbr.rel (0) target = $region9
    $region8: #{tpu_custom_call.1} parent=1 // pred_region
      %22 = dma.done [#allocation4], 128
    $region9: #{tpu_custom_call.1} parent=1 // pred_fallthru
      _
    %p23 = scmp.eq.s32.totalorder 0, 0
    // Predicated region
    $region10: #{tpu_custom_call.1} parent=1 // pred_check
      %p24 = pneg %p23
    $region11: #{tpu_custom_call.1} parent=1 // pred_check_branch
      %26 = sbr.rel (%p24) target = $region13
    $region12: #{tpu_custom_call.1} parent=1 // pred_region
      %vm27 = vcmask 64512
      %28 = vst.msk [vmem:[#allocation2] sm:$0xff] %vm27, 0.0
    $region13: #{tpu_custom_call.1} parent=1 // pred_fallthru
      _
    %v29 = vld [vmem:[#allocation3] sm:$0xff]
    %v30 = vld [vmem:[#allocation2] sm:$0xff]
    %vm31 = vcmask 261120
    %v33 = vsel %vm31, %v29, 0
    %35 = vmatpush.xpose.msra.mxu0 0.0
    %36 = vmatpush.xpose.msra.mxu0 0.0
    %37 = vmatpush.xpose.msra.mxu0 0.0
    %38 = vmatpush.xpose.msra.mxu0 0.0
    %39 = vmatpush.xpose.msra.mxu0 0.0
    %40 = vmatpush.xpose.msra.mxu0 0.0
    %41 = vmatpush.xpose.msra.mxu0 0.0
    %42 = vmatpush.xpose.msra.mxu0 0.0
    %43 = vmatpush.xpose.msra.mxu0 0.0
    %44 = vmatpush.xpose.msra.mxu0 0.0
    %45 = vmatpush.xpose.msra.mxu0 0.0
    %46 = vmatpush.xpose.msra.mxu0 0.0
    %47 = vmatpush.xpose.msra.mxu0 0.0
    %48 = vmatpush.xpose.msra.mxu0 0.0
    %49 = vmatpush.xpose.msra.mxu0 0.0
    %50 = vmatpush.xpose.msra.mxu0 %v33
    %51 = vmatmul.f32.gmra.mxu0 %v33
    %v52 = vpop.f32.mrf.mxu0
    %v53 = vadd.f32 0.0, %v52
    %54 = vdwg.mxu0
    %v55 = vadd.f32 %v30, %v53
    %vm56 = vcmask 64512
    %57 = vst.msk [vmem:[#allocation2] sm:$0xff] %vm56, %v55
    // Predicated region
    $region14: #{tpu_custom_call.1} parent=1 // pred_check
      %p58 = pneg %p23
    $region15: #{tpu_custom_call.1} parent=1 // pred_check_branch
      %60 = sbr.rel (%p58) target = $region17
    $region16: #{tpu_custom_call.1} parent=1 // pred_region
      %v61 = vld [vmem:[#allocation2] sm:$0xff]
      %v62 = vlaneseq
      %v63 = vshrl.u32 %v62, 7
      %v64 = vlaneseq
      %v65 = vand.u32 %v64, 127
      %vm66 = vcmp.eq.s32.totalorder %v63, %v65
      %v67 = vsel %vm66, %v61, 0.0
      %v68 = vsel %vm56, %v67, 0.0
      %69 = vadd.xlane.f32.xlu0 %v68
      %v70 = vpop.xlane.xlu0 %69
      %v71 = vrot.slane %v68, 4
      %v72 = vadd.f32 %v68, %v71
      %v73 = vrot.slane %v72, 2
      %v74 = vadd.f32 %v72, %v73
      %v75 = vrot.slane %v74, 1
      %v76 = vadd.f32 %v74, %v75
      %v77 = vrsqrt.pop %v70
      %v78 = vmul.f32 %v77, %v70
      %v79 = vmul.f32 %v78, %v77
      %v80 = vmul.f32 0.5, %v79
      %v81 = vsub.f32 1.5, %v80
      %v82 = vmul.f32 %v77, %v81
      %v83 = vmul.f32 %v70, %v82
      %vm84 = vcmp.eq.f32.partialorder %v70, inf
      %v85 = vsel %vm84, %v70, %v83
      %vm86 = vcmp.eq.f32.partialorder %v70, 0.0
      %v87 = vand.u32 %v70, 2147483648
      %v88 = vsel %vm86, %v87, %v85
      %v89 = vrsqrt.pop %v76
      %v90 = vmul.f32 %v89, %v76
      %v91 = vmul.f32 %v90, %v89
      %v92 = vmul.f32 0.5, %v91
      %v93 = vsub.f32 1.5, %v92
      %v94 = vmul.f32 %v89, %v93
      %v95 = vmul.f32 %v76, %v94
      %vm96 = vcmp.eq.f32.partialorder %v76, inf
      %v97 = vsel %vm96, %v76, %v95
      %vm98 = vcmp.eq.f32.partialorder %v76, 0.0
      %v99 = vand.u32 %v76, 2147483648
      %v100 = vsel %vm98, %v99, %v97
      %v101 = vmax.f32 %v70, 1e-24
      %v102 = vrsqrt.pop %v101
      %v103 = vmul.f32 %v102, %v101
      %v104 = vmul.f32 %v103, %v102
      %v105 = vmul.f32 0.5, %v104
      %v106 = vsub.f32 1.5, %v105
      %v107 = vmul.f32 %v102, %v106
      %vm108 = vweird.f32 %v101
      %vm109 = vweird.f32 %v102
      %vm110 = vmor %vm108, %vm109
      %v111 = vsel %vm110, %v102, %v107
      %v112 = vmax.f32 %v76, 1e-24
      %v113 = vrsqrt.pop %v112
      %v114 = vmul.f32 %v113, %v112
      %v115 = vmul.f32 %v114, %v113
      %v116 = vmul.f32 0.5, %v115
      %v117 = vsub.f32 1.5, %v116
      %v118 = vmul.f32 %v113, %v117
      %vm119 = vweird.f32 %v112
      %vm120 = vweird.f32 %v113
      %vm121 = vmor %vm119, %vm120
      %v122 = vsel %vm121, %v113, %v118
      %v123 = vsub.f32 %v88, %v100
      %v124 = vmul.f32 %v111, %v122
      %v125 = vmul.f32 %v61, %v124
      %v126 = vmul.f32 %v123, %v123
      %v127 = vmul.f32 %v126, 0.125
      %v128 = vsel %vm56, %v127, 0.0
      %129 = vadd.xlane.f32.xlu0 %v128
      %v130 = vpop.xlane.xlu0 %129
      %v131 = vrot.slane %v130, 4
      %v132 = vadd.f32 %v130, %v131
      %v133 = vrot.slane %v132, 2
      %v134 = vadd.f32 %v132, %v133
      %v135 = vrot.slane %v134, 1
      %v136 = vadd.f32 %v134, %v135
      %s137 = vtos %v136
      %v138 = vsub.f32 1.0, %v125
      %v139 = vmul.f32 %v138, 0.125
      %v140 = vsel %vm56, %v139, 0.0
      %141 = vadd.xlane.f32.xlu0 %v140
      %v142 = vpop.xlane.xlu0 %141
      %v143 = vrot.slane %v142, 4
      %v144 = vadd.f32 %v142, %v143
      %v145 = vrot.slane %v144, 2
      %v146 = vadd.f32 %v144, %v145
      %v147 = vrot.slane %v146, 1
      %v148 = vadd.f32 %v146, %v147
      %s149 = vtos %v148
      %s150 = sadd.f32 %s137, %s149
      %vm151 = vcmp.eq.s32.totalorder %v65, 0
      %vm152 = vcmp.eq.s32.totalorder %v65, 1
      %vm153 = vcmp.eq.s32.totalorder %v65, 2
      %v154 = vstv %s149
      %v155 = vsel %vm153, %v154, 0.0
      %v156 = vstv %s137
      %v157 = vsel %vm152, %v156, %v155
      %v158 = vstv %s150
      %v159 = vsel %vm151, %v158, %v157
      %160 = vst [vmem:[#allocation6] sm:$0x1] %v159
    $region17: #{tpu_custom_call.1} parent=1 // pred_fallthru
      _
    // Predicated region
    $region18: #{tpu_custom_call.1} parent=1 // pred_check
      _
    $region19: #{tpu_custom_call.1} parent=1 // pred_check_branch
      %162 = sbr.rel (0) target = $region21
    $region20: #{tpu_custom_call.1} parent=1 // pred_region
      %164 = vsyncadd [#allocation5], 0
      %s166 = sshll.u32 [#allocation6], 4
      %s167 = int_to_ptr.vmem [resolvable:$true] %s166
      %s168 = sshll.u32 %s1, 4
      %s169 = int_to_ptr.hbm [resolvable:$true] %s168
      %171 = dma.vmem_to_hbm [thread:$0]  %s167, 16, %s169, [#allocation5]
    $region21: #{tpu_custom_call.1} parent=1 // pred_fallthru
      _
    // Predicated region
    $region22: #{tpu_custom_call.1} parent=1 // pred_check
      _
    $region23: #{tpu_custom_call.1} parent=1 // pred_check_branch
      %173 = sbr.rel (0) target = $region25
    $region24: #{tpu_custom_call.1} parent=1 // pred_region
      %175 = dma.done [#allocation5], 16
    $region25: #{tpu_custom_call.1} parent=1 // pred_fallthru
      _
    %176 = vsyncpa [#allocation4], 1
    %177 = vsyncpa [#allocation5], 1

</llo_original>
